<compile_context>
chip_gen: v5e
topology: v5e:2x2
jax: 0.10.0
libtpu: 0.0.40
codegen_flags: <defaults>
</compile_context>

<pallas_src>
import jax
import jax.numpy as jnp
from jax.experimental import pallas as pl
from jax.experimental.pallas import tpu as pltpu

EPS = 1e-6
NUM_GROUPS = 32  # torch.nn.GroupNorm(num_groups=32, ...)


def _pick_tile(n, cap):
    """Largest multiple-of-8 divisor of n that is <= cap (or n itself if n <= cap)."""
    if n <= cap:
        return n
    t = (cap // 8) * 8
    while t >= 8:
        if n % t == 0:
            return t
        t -= 8
    # TODO(synk): pad HW up to a tile multiple and mask the softmax tail instead of
    #             falling back to a full-row tile for awkward spatial sizes.
    return n


def _vmem_cap_bytes():
    try:
        return int(pltpu.get_tpu_info().vmem_capacity_bytes)
    except Exception:
        return 64 << 20  # conservative fallback: v7x per-TensorCore VMEM


def _vmem_limit(est_bytes):
    """~2x headroom over the static estimate, clamped to 75% of physical VMEM."""
    hi = int(_vmem_cap_bytes() * 3 // 4)
    return int(min(max(2 * est_bytes, 24 << 20), hi))


def spatial_self_attention(x_nchw, params, *, tq=None, tk=None):
    b, c, h, w = x_nchw.shape
    assert c % NUM_GROUPS == 0, "GroupNorm(32) requires C % 32 == 0"
    hw = h * w
    cg = c // NUM_GROUPS

    # Pad channels to a multiple of 128 (lane-dense stores, full MXU width).
    c_pad = ((c + 127) // 128) * 128
    pad = c_pad - c

    tq = tq or _pick_tile(hw, 512)   # larger tiles: fewer acc rescales / less per-step overhead
    tk = tk or _pick_tile(hw, 512)
    tr = _pick_tile(hw, 2048)        # stage-1 stats: pure HBM streaming, big tiles win
    tp = _pick_tile(hw, 512)         # stage-2 qkv projection row tile
    nq, nk = hw // tq, hw // tk

    # ---- wrapper-side layout plumbing (channels-last, f32, lane padded) ----
    # TODO(synk): fold the NCHW -> (B, HW, C_pad) relayout (and the inverse transpose
    #             on the output) into the Pallas passes to save an activation round trip.
    x = jnp.transpose(x_nchw, (0, 2, 3, 1)).reshape(b, hw, c).astype(jnp.float32)
    if pad:
        x = jnp.pad(x, ((0, 0), (0, 0), (0, pad)))

    softmax_scale = float(c) ** (-0.5)   # original channel count, not padded

    def pad_vec(v, scale=1.0):
        v = v.reshape(-1).astype(jnp.float32) * scale
        return jnp.pad(v, (0, pad)).reshape(1, c_pad)

    def pad_mat(wm, scale=1.0):
        # conv weight (C_out, C_in, 1, 1) -> (C_in, C_out) so kernels do xn @ W
        wm = wm.reshape(c, c).T.astype(jnp.float32) * scale
        return jnp.pad(wm, ((0, pad), (0, pad)))

    gamma, beta = pad_vec(params["gamma"]), pad_vec(params["beta"])
    # 1/sqrt(C) folded into the q projection; q/k/v fused into one wide matmul.
    w_qkv = jnp.concatenate(
        [pad_mat(params["wq"], softmax_scale), pad_mat(params["wk"]), pad_mat(params["wv"])],
        axis=1).astype(jnp.bfloat16)                       # (C_pad, 3*C_pad)
    b_qkv = jnp.concatenate(
        [pad_vec(params["bq"], softmax_scale), pad_vec(params["bk"]), pad_vec(params["bv"])],
        axis=1)                                            # (1, 3*C_pad) f32
    wp = pad_mat(params["wp"]).astype(jnp.bfloat16)
    bp = pad_vec(params["bp"])

    # One-hot channel -> group membership; zero rows for padded channels.
    ch = jnp.arange(c_pad)
    gmat = ((ch[:, None] < c) &
            ((ch[:, None] // cg) == jnp.arange(NUM_GROUPS)[None, :])).astype(jnp.float32)

    n_per_group = float(hw * cg)   # elements per group (biased variance, like torch)

    # ============== stage 1: GroupNorm stats -> per-channel scale/shift ==============
    def gn_stats_kernel(x_ref, gamma_ref, beta_ref, gmat_ref,
                        scale_ref, shift_ref, sum_sc, sq_sc):
        ri = pl.program_id(1)

        @pl.when(ri == 0)
        def _():
            sum_sc[...] = jnp.zeros_like(sum_sc)
            sq_sc[...] = jnp.zeros_like(sq_sc)

        xt = x_ref[0]                                              # (TR, C_pad) f32
        ones = jnp.ones((1, xt.shape[0]), jnp.float32)
        # sublane reductions as MXU matmuls instead of axis-0 XLU reductions
        sum_sc[...] += jnp.dot(ones, xt, preferred_element_type=jnp.float32)
        sq_sc[...] += jnp.dot(ones, xt * xt, preferred_element_type=jnp.float32)

        @pl.when(ri == pl.num_programs(1) - 1)
        def _():
            gm = gmat_ref[...]                                     # (C_pad, G)
            sum_g = jnp.dot(sum_sc[...], gm, preferred_element_type=jnp.float32)
            sq_g = jnp.dot(sq_sc[...], gm, preferred_element_type=jnp.float32)
            mean_g = sum_g / n_per_group
            # E[x^2]-E[x]^2 can go slightly negative from cancellation; clamp.
            # TODO(synk): switch to shifted sums if activations are far from zero-mean.
            var_g = jnp.maximum(sq_g / n_per_group - mean_g * mean_g, 0.0)
            inv_g = jax.lax.rsqrt(var_g + EPS)
            dims = (((1,), (1,)), ((), ()))                        # (1,G) x (C,G)^T -> (1,C)
            mean_c = jax.lax.dot_general(mean_g, gm, dims,
                                         preferred_element_type=jnp.float32)
            inv_c = jax.lax.dot_general(inv_g, gm, dims,
                                        preferred_element_type=jnp.float32)
            sc = inv_c * gamma_ref[...]
            scale_ref[0] = sc
            shift_ref[0] = beta_ref[...] - mean_c * sc

    stat_vec = pl.BlockSpec((1, c_pad), lambda b_, r_: (0, 0))
    est1 = (tr * c_pad * 4) * 2 + c_pad * NUM_GROUPS * 4 + 16 * c_pad * 4
    scale, shift = pl.pallas_call(
        gn_stats_kernel,
        out_shape=(jax.ShapeDtypeStruct((b, 1, c_pad), jnp.float32),
                   jax.ShapeDtypeStruct((b, 1, c_pad), jnp.float32)),
        grid_spec=pltpu.PrefetchScalarGridSpec(
            num_scalar_prefetch=0,
            grid=(b, hw // tr),
            in_specs=[
                pl.BlockSpec((1, tr, c_pad), lambda b_, r_: (b_, r_, 0)),   # x row tile
                stat_vec, stat_vec,                                         # gamma, beta
                pl.BlockSpec((c_pad, NUM_GROUPS), lambda b_, r_: (0, 0)),   # group membership
            ],
            out_specs=[pl.BlockSpec((1, 1, c_pad), lambda b_, r_: (b_, 0, 0)),
                       pl.BlockSpec((1, 1, c_pad), lambda b_, r_: (b_, 0, 0))],
            scratch_shapes=[pltpu.VMEM((1, c_pad), jnp.float32),
                            pltpu.VMEM((1, c_pad), jnp.float32)]),
        compiler_params=pltpu.CompilerParams(
            dimension_semantics=("parallel", "arbitrary"),
            vmem_limit_bytes=_vmem_limit(est1)),
    )(x, gamma, beta, gmat)

    # ============== stage 2: fused GroupNorm affine + Q/K/V projection pass ==============
    def qkv_kernel(x_ref, scale_ref, shift_ref, w_ref, b_ref, q_ref, k_ref, v_ref):
        xn = (x_ref[0] * scale_ref[0] + shift_ref[0]).astype(jnp.bfloat16)   # (TP, C_pad)
        qkv = jnp.dot(xn, w_ref[...], preferred_element_type=jnp.float32) + b_ref[...]
        qkv = qkv.astype(jnp.bfloat16)                                       # (TP, 3*C_pad)
        q_ref[0] = qkv[:, :c_pad]              # already carries the 1/sqrt(C) scale
        k_ref[0] = qkv[:, c_pad:2 * c_pad]
        v_ref[0] = qkv[:, 2 * c_pad:]

    # TODO(synk): single-buffer the constant W_qkv block via pipeline_mode=pl.Buffered(1)
    #             once verified on the target toolchain (saves 3*c_pad^2*2 B of VMEM).
    bcast_vec = pl.BlockSpec((1, 1, c_pad), lambda b_, r_: (b_, 0, 0))
    qkv_out_spec = pl.BlockSpec((1, tp, c_pad), lambda b_, r_: (b_, r_, 0))
    qkv_out_shape = jax.ShapeDtypeStruct((b, hw, c_pad), jnp.bfloat16)
    est2 = ((tp * c_pad * 4) * 2 + (3 * c_pad * c_pad * 2) * 2 + (3 * c_pad * 4) * 2
            + 3 * (tp * c_pad * 2) * 2 + tp * 3 * c_pad * 6 + tp * c_pad * 2)
    q_all, k_all, v_all = pl.pallas_call(
        qkv_kernel,
        out_shape=(qkv_out_shape, qkv_out_shape, qkv_out_shape),
        grid_spec=pltpu.PrefetchScalarGridSpec(
            num_scalar_prefetch=0,
            grid=(b, hw // tp),
            in_specs=[
                pl.BlockSpec((1, tp, c_pad), lambda b_, r_: (b_, r_, 0)),   # x row tile
                bcast_vec, bcast_vec,                                       # scale, shift
                pl.BlockSpec((c_pad, 3 * c_pad), lambda b_, r_: (0, 0)),    # fused W_qkv
                pl.BlockSpec((1, 3 * c_pad), lambda b_, r_: (0, 0)),        # fused bias
            ],
            out_specs=[qkv_out_spec, qkv_out_spec, qkv_out_spec]),
        compiler_params=pltpu.CompilerParams(
            dimension_semantics=("parallel", "parallel"),
            vmem_limit_bytes=_vmem_limit(est2)),
    )(x, scale, shift, w_qkv, b_qkv)

    # ============== stage 3: flash-style attention + proj + residual ==============
    def attn_kernel(q_ref, k_ref, v_ref, xres_ref, wp_ref, bp_ref, o_ref,
                    m_sc, l_sc, acc_sc):
        ki = pl.program_id(2)

        @pl.when(ki == 0)
        def _():
            m_sc[...] = jnp.full(m_sc.shape, -jnp.inf, jnp.float32)
            l_sc[...] = jnp.zeros(l_sc.shape, jnp.float32)
            acc_sc[...] = jnp.zeros(acc_sc.shape, jnp.float32)

        # s = q @ k^T without an explicit transpose: contract last dims (bf16 MXU).
        s = jax.lax.dot_general(q_ref[0], k_ref[0], (((1,), (1,)), ((), ())),
                                preferred_element_type=jnp.float32)   # (TQ, TK) f32

        # online softmax (f32 statistics)
        m_prev = m_sc[...]
        m_new = jnp.maximum(m_prev, jnp.max(s, axis=-1, keepdims=True))
        alpha = jnp.exp(m_prev - m_new)
        p = jnp.exp(s - m_new)
        l_sc[...] = alpha * l_sc[...] + jnp.sum(p, axis=-1, keepdims=True)
        acc_sc[...] = alpha * acc_sc[...] + jnp.dot(
            p.astype(jnp.bfloat16), v_ref[0], preferred_element_type=jnp.float32)
        m_sc[...] = m_new

        @pl.when(ki == pl.num_programs(2) - 1)
        def _():
            # deferred normalization: one EUP reciprocal on the (TQ, C) result
            out = acc_sc[...] * pl.reciprocal(l_sc[...], approx=True)
            hproj = jnp.dot(out.astype(jnp.bfloat16), wp_ref[...],
                            preferred_element_type=jnp.float32) + bp_ref[...]
            o_ref[0] = xres_ref[0] + hproj                            # residual in f32

    q_spec = pl.BlockSpec((1, tq, c_pad), lambda b_, q_, k_: (b_, q_, 0))
    kv_spec = pl.BlockSpec((1, tk, c_pad), lambda b_, q_, k_: (b_, k_, 0))
    est3 = ((tq * c_pad * 2) * 2 + 2 * (tk * c_pad * 2) * 2 + 2 * (tq * c_pad * 4) * 2
            + (c_pad * c_pad * 2) * 2 + (c_pad * 4) * 2
            + tq * c_pad * 8 + 2 * tq * 4 + 3 * tq * tk * 4)

    out = pl.pallas_call(
        attn_kernel,
        out_shape=jax.ShapeDtypeStruct((b, hw, c_pad), jnp.float32),
        grid_spec=pltpu.PrefetchScalarGridSpec(
            num_scalar_prefetch=0,
            # B*nq parallel q-tiles feed both v7x TensorCores; kv axis is the reduction.
            grid=(b, nq, nk),
            in_specs=[
                q_spec,                                                     # bf16 q (pre-scaled)
                kv_spec, kv_spec,                                           # bf16 k / v streams
                q_spec,                                                     # f32 x (residual)
                pl.BlockSpec((c_pad, c_pad), lambda b_, q_, k_: (0, 0)),    # wp
                pl.BlockSpec((1, c_pad), lambda b_, q_, k_: (0, 0)),        # bp
            ],
            out_specs=pl.BlockSpec((1, tq, c_pad), lambda b_, q_, k_: (b_, q_, 0)),
            scratch_shapes=[
                pltpu.VMEM((tq, 1), jnp.float32),        # running max m
                pltpu.VMEM((tq, 1), jnp.float32),        # running sum l
                pltpu.VMEM((tq, c_pad), jnp.float32),    # output accumulator
            ]),
        compiler_params=pltpu.CompilerParams(
            dimension_semantics=("parallel", "parallel", "arbitrary"),
            vmem_limit_bytes=_vmem_limit(est3)),
    )(q_all, k_all, v_all, x, wp, bp)

    out = out[..., :c].reshape(b, h, w, c)
    return jnp.transpose(out, (0, 3, 1, 2))


def reference(x_nchw, params):
    # Pure-JAX f32 mirror of the PyTorch forward, for verification.
    b, c, h, w = x_nchw.shape
    cg = c // NUM_GROUPS
    xg = x_nchw.reshape(b, NUM_GROUPS, cg, h, w)
    mean = xg.mean(axis=(2, 3, 4), keepdims=True)
    var = xg.var(axis=(2, 3, 4), keepdims=True)
    xn = ((xg - mean) / jnp.sqrt(var + EPS)).reshape(b, c, h, w)
    xn = xn * params["gamma"][None, :, None, None] + params["beta"][None, :, None, None]

    def conv1x1(t, wk_, bk_):
        wmat = params[wk_].reshape(c, c)
        return jnp.einsum("oc,bchw->bohw", wmat, t) + params[bk_][None, :, None, None]

    q = conv1x1(xn, "wq", "bq")
    k = conv1x1(xn, "wk", "bk")
    v = conv1x1(xn, "wv", "bv")
    q = q.reshape(b, c, h * w).transpose(0, 2, 1)         # b (hw) c
    k = k.reshape(b, c, h * w)                            # b c (hw)
    v = v.reshape(b, c, h * w)                            # b c (hw)
    wattn = jnp.einsum("bij,bjk->bik", q, k) * (float(c) ** -0.5)
    wattn = jax.nn.softmax(wattn, axis=2)
    ho = jnp.einsum("bck,bqk->bcq", v, wattn).reshape(b, c, h, w)
    ho = conv1x1(ho, "wp", "bp")
    return x_nchw + ho


if __name__ == "__main__":
    key = jax.random.PRNGKey(0)
    B, C, H, W = 2, 32, 8, 8   # C must be divisible by 32 for GroupNorm(32, ...)
    keys = jax.random.split(key, 12)

    x = jax.random.normal(keys[0], (B, C, H, W), dtype=jnp.float32)
    s = 1.0 / jnp.sqrt(float(C))
    params = {
        "gamma": 1.0 + 0.1 * jax.random.normal(keys[1], (C,), jnp.float32),
        "beta": 0.1 * jax.random.normal(keys[2], (C,), jnp.float32),
        "wq": s * jax.random.normal(keys[3], (C, C, 1, 1), jnp.float32),
        "bq": 0.05 * jax.random.normal(keys[4], (C,), jnp.float32),
        "wk": s * jax.random.normal(keys[5], (C, C, 1, 1), jnp.float32),
        "bk": 0.05 * jax.random.normal(keys[6], (C,), jnp.float32),
        "wv": s * jax.random.normal(keys[7], (C, C, 1, 1), jnp.float32),
        "bv": 0.05 * jax.random.normal(keys[8], (C,), jnp.float32),
        "wp": s * jax.random.normal(keys[9], (C, C, 1, 1), jnp.float32),
        "bp": 0.05 * jax.random.normal(keys[10], (C,), jnp.float32),
    }

    out = spatial_self_attention(x, params)
    out = jax.block_until_ready(out)

    ref = jax.block_until_ready(reference(x, params))
    assert out.shape == (B, C, H, W)
    err = jnp.max(jnp.abs(out - ref))
    # bf16 MXU operands / bf16 K-V slabs with f32 accumulation -> looser tolerance than f32
    assert jnp.allclose(out, ref, atol=3e-2, rtol=3e-2), f"max abs err = {err}"

    print("KERNEL_OK")
</pallas_src>

<mosaic_0001>
module attributes {stable_mosaic.version = 11 : i64} {
  func.func @gn_stats_kernel(%arg0: i32, %arg1: i32, %arg2: memref<1x64x128xf32, #tpu.memory_space<vmem>>, %arg3: memref<1x128xf32, #tpu.memory_space<vmem>>, %arg4: memref<1x128xf32, #tpu.memory_space<vmem>>, %arg5: memref<128x32xf32, #tpu.memory_space<vmem>>, %arg6: memref<1x1x128xf32, #tpu.memory_space<vmem>>, %arg7: memref<1x1x128xf32, #tpu.memory_space<vmem>>, %arg8: memref<1x128xf32, #tpu.memory_space<vmem>>, %arg9: memref<1x128xf32, #tpu.memory_space<vmem>>) attributes {dimension_semantics = [#tpu.dimension_semantics<parallel>, #tpu.dimension_semantics<arbitrary>], iteration_bounds = array<i64: 2, 1>, scalar_prefetch = 0 : i64, scratch_operands = 2 : i64, tpu.core_type = #tpu.core_type<tc>, window_params = [{transform_indices = @transform_0, window_bounds = array<i64: 1, 64, 128>}, {pipeline_mode = #tpu.pipeline_mode<synchronous>, transform_indices = @transform_1, window_bounds = array<i64: 1, 128>}, {pipeline_mode = #tpu.pipeline_mode<synchronous>, transform_indices = @transform_2, window_bounds = array<i64: 1, 128>}, {pipeline_mode = #tpu.pipeline_mode<synchronous>, transform_indices = @transform_3, window_bounds = array<i64: 128, 32>}, {transform_indices = @transform_4, window_bounds = array<i64: 1, 1, 128>}, {transform_indices = @transform_5, window_bounds = array<i64: 1, 1, 128>}]} {
    %c0_i32 = arith.constant 0 : i32
    %0 = arith.cmpi eq, %arg1, %c0_i32 : i32
    %1 = arith.extui %0 : i1 to i32
    %c0_i32_0 = arith.constant 0 : i32
    %2 = arith.cmpi ne, %1, %c0_i32_0 : i32
    scf.if %2 {
      %cst_15 = arith.constant 0.000000e+00 : f32
      %18 = vector.broadcast %cst_15 : f32 to vector<1x128xf32>
      %c0_16 = arith.constant 0 : index
      %c0_17 = arith.constant 0 : index
      %19 = vector.load %arg8[%c0_16, %c0_17] : memref<1x128xf32, #tpu.memory_space<vmem>>, vector<1x128xf32>
      tpu.vector_store %arg8[%c0_16, %c0_17], %18 {strides = array<i32>} : memref<1x128xf32, #tpu.memory_space<vmem>>, vector<1x128xf32>,
      %cst_18 = arith.constant 0.000000e+00 : f32
      %20 = vector.broadcast %cst_18 : f32 to vector<1x128xf32>
      %c0_19 = arith.constant 0 : index
      %c0_20 = arith.constant 0 : index
      %21 = vector.load %arg9[%c0_19, %c0_20] : memref<1x128xf32, #tpu.memory_space<vmem>>, vector<1x128xf32>
      tpu.vector_store %arg9[%c0_19, %c0_20], %20 {strides = array<i32>} : memref<1x128xf32, #tpu.memory_space<vmem>>, vector<1x128xf32>,
    } else {
    }
    %c0 = arith.constant 0 : index
    %c0_1 = arith.constant 0 : index
    %c0_2 = arith.constant 0 : index
    %3 = vector.load %arg2[%c0, %c0_1, %c0_2] : memref<1x64x128xf32, #tpu.memory_space<vmem>>, vector<1x64x128xf32>
    %4 = vector.shape_cast %3 : vector<1x64x128xf32> to vector<64x128xf32>
    %cst = arith.constant 1.000000e+00 : f32
    %5 = vector.broadcast %cst : f32 to vector<1x64xf32>
    %c0_3 = arith.constant 0 : index
    %c0_4 = arith.constant 0 : index
    %6 = vector.load %arg8[%c0_3, %c0_4] : memref<1x128xf32, #tpu.memory_space<vmem>>, vector<1x128xf32>
    %cst_5 = arith.constant dense<0.000000e+00> : vector<1x128xf32>
    %7 = tpu.matmul %5, %4, %cst_5 {dimension_numbers = #tpu.dot_dimension_numbers<[1], [0], [0], [1], [0, 0, 1, 1], [], []>} : vector<1x64xf32>, vector<64x128xf32>, vector<1x128xf32> -> vector<1x128xf32>
    %8 = arith.addf %6, %7 : vector<1x128xf32>
    %c0_6 = arith.constant 0 : index
    %c0_7 = arith.constant 0 : index
    %9 = vector.load %arg8[%c0_6, %c0_7] : memref<1x128xf32, #tpu.memory_space<vmem>>, vector<1x128xf32>
    tpu.vector_store %arg8[%c0_6, %c0_7], %8 {strides = array<i32>} : memref<1x128xf32, #tpu.memory_space<vmem>>, vector<1x128xf32>,
    %c0_8 = arith.constant 0 : index
    %c0_9 = arith.constant 0 : index
    %10 = vector.load %arg9[%c0_8, %c0_9] : memref<1x128xf32, #tpu.memory_space<vmem>>, vector<1x128xf32>
    %11 = arith.mulf %4, %4 : vector<64x128xf32>
    %cst_10 = arith.constant dense<0.000000e+00> : vector<1x128xf32>
    %12 = tpu.matmul %5, %11, %cst_10 {dimension_numbers = #tpu.dot_dimension_numbers<[1], [0], [0], [1], [0, 0, 1, 1], [], []>} : vector<1x64xf32>, vector<64x128xf32>, vector<1x128xf32> -> vector<1x128xf32>
    %13 = arith.addf %10, %12 : vector<1x128xf32>
    %c0_11 = arith.constant 0 : index
    %c0_12 = arith.constant 0 : index
    %14 = vector.load %arg9[%c0_11, %c0_12] : memref<1x128xf32, #tpu.memory_space<vmem>>, vector<1x128xf32>
    tpu.vector_store %arg9[%c0_11, %c0_12], %13 {strides = array<i32>} : memref<1x128xf32, #tpu.memory_space<vmem>>, vector<1x128xf32>,
    %c0_i32_13 = arith.constant 0 : i32
    %15 = arith.cmpi eq, %arg1, %c0_i32_13 : i32
    %16 = arith.extui %15 : i1 to i32
    %c0_i32_14 = arith.constant 0 : i32
    %17 = arith.cmpi ne, %16, %c0_i32_14 : i32
    scf.if %17 {
      %c0_15 = arith.constant 0 : index
      %c0_16 = arith.constant 0 : index
      %18 = vector.load %arg5[%c0_15, %c0_16] : memref<128x32xf32, #tpu.memory_space<vmem>>, vector<128x32xf32>
      %c0_17 = arith.constant 0 : index
      %c0_18 = arith.constant 0 : index
      %19 = vector.load %arg8[%c0_17, %c0_18] : memref<1x128xf32, #tpu.memory_space<vmem>>, vector<1x128xf32>
      %cst_19 = arith.constant dense<0.000000e+00> : vector<1x32xf32>
      %20 = tpu.matmul %19, %18, %cst_19 {dimension_numbers = #tpu.dot_dimension_numbers<[1], [0], [0], [1], [0, 0, 1, 1], [], []>} : vector<1x128xf32>, vector<128x32xf32>, vector<1x32xf32> -> vector<1x32xf32>
      %c0_20 = arith.constant 0 : index
      %c0_21 = arith.constant 0 : index
      %21 = vector.load %arg9[%c0_20, %c0_21] : memref<1x128xf32, #tpu.memory_space<vmem>>, vector<1x128xf32>
      %cst_22 = arith.constant dense<0.000000e+00> : vector<1x32xf32>
      %22 = tpu.matmul %21, %18, %cst_22 {dimension_numbers = #tpu.dot_dimension_numbers<[1], [0], [0], [1], [0, 0, 1, 1], [], []>} : vector<1x128xf32>, vector<128x32xf32>, vector<1x32xf32> -> vector<1x32xf32>
      %cst_23 = arith.constant 6.400000e+01 : f32
      %23 = vector.broadcast %cst_23 : f32 to vector<1x32xf32>
      %24 = arith.divf %20, %23 : vector<1x32xf32>
      %cst_24 = arith.constant 6.400000e+01 : f32
      %25 = vector.broadcast %cst_24 : f32 to vector<1x32xf32>
      %26 = arith.divf %22, %25 : vector<1x32xf32>
      %27 = arith.mulf %24, %24 : vector<1x32xf32>
      %28 = arith.subf %26, %27 : vector<1x32xf32>
      %cst_25 = arith.constant 0.000000e+00 : f32
      %29 = vector.broadcast %cst_25 : f32 to vector<1x32xf32>
      %30 = arith.maximumf %28, %29 : vector<1x32xf32>
      %cst_26 = arith.constant 9.99999997E-7 : f32
      %31 = vector.broadcast %cst_26 : f32 to vector<1x32xf32>
      %32 = arith.addf %30, %31 : vector<1x32xf32>
      %33 = math.rsqrt %32 : vector<1x32xf32>
      %cst_27 = arith.constant dense<0.000000e+00> : vector<1x128xf32>
      %34 = tpu.matmul %24, %18, %cst_27 {dimension_numbers = #tpu.dot_dimension_numbers<[1], [1], [0], [0], [0, 0, 1, 0], [], []>} : vector<1x32xf32>, vector<128x32xf32>, vector<1x128xf32> -> vector<1x128xf32>
      %cst_28 = arith.constant dense<0.000000e+00> : vector<1x128xf32>
      %35 = tpu.matmul %33, %18, %cst_28 {dimension_numbers = #tpu.dot_dimension_numbers<[1], [1], [0], [0], [0, 0, 1, 0], [], []>} : vector<1x32xf32>, vector<128x32xf32>, vector<1x128xf32> -> vector<1x128xf32>
      %c0_29 = arith.constant 0 : index
      %c0_30 = arith.constant 0 : index
      %36 = vector.load %arg3[%c0_29, %c0_30] : memref<1x128xf32, #tpu.memory_space<vmem>>, vector<1x128xf32>
      %37 = arith.mulf %35, %36 : vector<1x128xf32>
      %c0_31 = arith.constant 0 : index
      %c0_32 = arith.constant 0 : index
      %c0_33 = arith.constant 0 : index
      %38 = vector.load %arg6[%c0_31, %c0_32, %c0_33] : memref<1x1x128xf32, #tpu.memory_space<vmem>>, vector<1x1x128xf32>
      %39 = vector.shape_cast %38 : vector<1x1x128xf32> to vector<1x128xf32>
      %40 = vector.shape_cast %37 : vector<1x128xf32> to vector<1x1x128xf32>
      tpu.vector_store %arg6[%c0_31, %c0_32, %c0_33], %40 {strides = array<i32>} : memref<1x1x128xf32, #tpu.memory_space<vmem>>, vector<1x1x128xf32>,
      %c0_34 = arith.constant 0 : index
      %c0_35 = arith.constant 0 : index
      %41 = vector.load %arg4[%c0_34, %c0_35] : memref<1x128xf32, #tpu.memory_space<vmem>>, vector<1x128xf32>
      %42 = arith.mulf %34, %37 : vector<1x128xf32>
      %43 = arith.subf %41, %42 : vector<1x128xf32>
      %c0_36 = arith.constant 0 : index
      %c0_37 = arith.constant 0 : index
      %c0_38 = arith.constant 0 : index
      %44 = vector.load %arg7[%c0_36, %c0_37, %c0_38] : memref<1x1x128xf32, #tpu.memory_space<vmem>>, vector<1x1x128xf32>
      %45 = vector.shape_cast %44 : vector<1x1x128xf32> to vector<1x128xf32>
      %46 = vector.shape_cast %43 : vector<1x128xf32> to vector<1x1x128xf32>
      tpu.vector_store %arg7[%c0_36, %c0_37, %c0_38], %46 {strides = array<i32>} : memref<1x1x128xf32, #tpu.memory_space<vmem>>, vector<1x1x128xf32>,
    } else {
    }
    return
  }
  func.func @transform_0(%arg0: i32, %arg1: i32) -> (i32, i32, i32) {
    %c0_i32 = arith.constant 0 : i32
    %c0_i32_0 = arith.constant 0 : i32
    return %arg0, %arg1, %c0_i32 : i32, i32, i32
  }
  func.func @transform_1(%arg0: i32, %arg1: i32) -> (i32, i32) {
    %c0_i32 = arith.constant 0 : i32
    %c0_i32_0 = arith.constant 0 : i32
    %c0_i32_1 = arith.constant 0 : i32
    return %c0_i32, %c0_i32_0 : i32, i32
  }
  func.func @transform_2(%arg0: i32, %arg1: i32) -> (i32, i32) {
    %c0_i32 = arith.constant 0 : i32
    %c0_i32_0 = arith.constant 0 : i32
    %c0_i32_1 = arith.constant 0 : i32
    return %c0_i32, %c0_i32_0 : i32, i32
  }
  func.func @transform_3(%arg0: i32, %arg1: i32) -> (i32, i32) {
    %c0_i32 = arith.constant 0 : i32
    %c0_i32_0 = arith.constant 0 : i32
    %c0_i32_1 = arith.constant 0 : i32
    return %c0_i32, %c0_i32_0 : i32, i32
  }
  func.func @transform_4(%arg0: i32, %arg1: i32) -> (i32, i32, i32) {
    %c0_i32 = arith.constant 0 : i32
    %c0_i32_0 = arith.constant 0 : i32
    %c0_i32_1 = arith.constant 0 : i32
    return %arg0, %c0_i32, %c0_i32_0 : i32, i32, i32
  }
  func.func @transform_5(%arg0: i32, %arg1: i32) -> (i32, i32, i32) {
    %c0_i32 = arith.constant 0 : i32
    %c0_i32_0 = arith.constant 0 : i32
    %c0_i32_1 = arith.constant 0 : i32
    return %arg0, %c0_i32, %c0_i32_0 : i32, i32, i32
  }
}

</mosaic_0001>

<llo_original>
// kernel: tpu_custom_call.1
$region0: #{tpu_custom_call.1}
  #allocation0 [shape = 'u32[]', space=smem, size = 0x4, offset = 0x4, fixed_abs, tag = 'smem constant byte address 0x4 - core index']
  #allocation1 [shape = 'u32[72,128]{1,0:T(1,128)}', space=vmem, size = 0x9000, scoped, tag = 'internal scratch']
  #allocation2 [shape = 'f32[1,128]{1,0:T(1,128)}', space=vmem, size = 0x200, scoped, tag = 'scratch operand']
  #allocation3 [shape = 'f32[1,128]{1,0:T(1,128)}', space=vmem, size = 0x200, scoped, tag = 'scratch operand']
  %s0 = inlined_call_operand.vmem [shape: f32[2,64,128], index: 0, kind: input, shape index: {}]
  %s1 = inlined_call_operand.vmem [shape: f32[1,128], index: 1, kind: input, shape index: {}]
  %s2 = inlined_call_operand.vmem [shape: f32[1,128], index: 2, kind: input, shape index: {}]
  %s3 = inlined_call_operand.vmem [shape: f32[128,32], index: 3, kind: input, shape index: {}]
  %s4 = inlined_call_operand.hbm [shape: f32[2,1,128], index: 4, kind: output, shape index: {0}]
  %s5 = inlined_call_operand.hbm [shape: f32[2,1,128], index: 5, kind: output, shape index: {1}]
  %6 = xla_tuple %s4, %s5
  %s7 = sld [smem:[#allocation0]]
  $region65: #{tpu_custom_call.1} parent=0
    _
  %s9 = ssub.s32 1, %s7
  %s10 = scalar_select 0, %s9, %s7
  $region1: #{tpu_custom_call.1} parent=0
    #allocation4 [shape = 'u8[1024]{0}', space=vmem, size = 0x400, scoped, tag = 'output window, operand 0']
    #allocation5 [shape = 's32[2]{0}', space=sflag, size = 0x8, scoped, tag = 'scoped memory for tpu_custom_call.1']
    #allocation6 [shape = 'u8[1024]{0}', space=vmem, size = 0x400, scoped, tag = 'output window, operand 1']
    #allocation7 [shape = 's32[2]{0}', space=sflag, size = 0x8, scoped, tag = 'scoped memory for tpu_custom_call.1']
    %11 = vsyncpa [#allocation5], 0
    %s12 = scalar_lea.sflag [#allocation5], 1
    %13 = vsyncpa %s12, 0
    %14 = vsyncpa [#allocation7], 0
    %s15 = scalar_lea.sflag [#allocation7], 1
    %16 = vsyncpa %s15, 0
    loop: start=0, step=1, limit=4
    $region2: #{tpu_custom_call.1} parent=1 // loop_pre_header
      _
    $region3: #{tpu_custom_call.1} parent=1 // loop_header
      %s18 = sphi 0, %s22
      %p19 = scmp.ge.s32.totalorder %s18, 4
      %s25 = sphi 0, %s37
      %s26 = sphi 0, %s33
      %s27 = sphi 0, %s25
      %s28 = sphi 0, %s26
      %s29 = sphi 0, %s27
      %s30 = sphi 0, %s28
      %s42 = sphi 0, %s44
      %s45 = sphi 0, %s42
      %s46 = sphi 0, %s45
      %s62 = sphi 0, %s46
      %s66 = sphi 0, %s66
      %s68 = sphi 0, %s66
      %s69 = sphi 0, %s68
      %s83 = sphi 0, %s69
      %s87 = sphi 0, %s87
      %s89 = sphi 0, %s87
      %s90 = sphi 0, %s89
      %s104 = sphi 0, %s90
      %s108 = sphi 0, %s108
      %s110 = sphi 0, %s108
      %s111 = sphi 0, %s110
      %s125 = sphi 0, %s111
      %s131 = sphi 0, %s133
      %s134 = sphi 0, %s131
      %s135 = sphi 0, %s134
      %s151 = sphi 0, %s135
      %s157 = sphi 0, %s159
      %s160 = sphi 0, %s157
      %s161 = sphi 0, %s160
      %s177 = sphi 0, %s161
    $region4: #{tpu_custom_call.1} parent=1 // loop_header_branch
      %21 = sbr.rel (%p19) target = $region8
    $region5: #{tpu_custom_call.1} parent=1 // loop_body
      %s23 = ssub.s32 %s18, 1
      %s24 = ssub.s32 %s18, 2
      %s31 = sadd.s32 1, %s26
      %p32 = scmp.ge.s32.totalorder %s31, 1
      %s33 = scalar_select %p32, 0, %s31
      %s34 = sadd.s32 1, %s25
      %s35 = scalar_select %p32, %s34, %s25
      %p36 = scmp.ge.s32.totalorder %s35, 2
      %s37 = scalar_select %p36, 0, %s35
      %s38 = ssub.s32 %s25, %s37
      %s39 = ssub.s32 %s26, %s33
      %s40 = sor.u32 %s38, %s39
      %p41 = scmp.eq.s32.totalorder %s40, 0
      %s43 = sadd.s32 %s42, 1
      %s44 = scalar_select %p41, %s42, %s43
      %p47 = pneg %p41
      %p48 = scmp.eq.s32.totalorder %s18, 1
      %p49 = por %p47, %p48
      %p50 = scmp.ne.s32.totalorder %s42, %s45
      %p51 = scmp.eq.s32.totalorder %s18, 0
      %p52 = por %p50, %p51
      %p53 = scmp.ne.s32.totalorder %s42, %s45
      %p54 = scmp.eq.s32.totalorder %s23, 1
      %p55 = por %p53, %p54
      %p56 = scmp.ne.s32.totalorder %s45, %s46
      %p57 = scmp.eq.s32.totalorder %s23, 0
      %p58 = por %p56, %p57
      %p59 = scmp.ne.s32.totalorder %s45, %s46
      %p60 = scmp.eq.s32.totalorder %s24, 1
      %p61 = por %p59, %p60
      %p63 = scmp.ne.s32.totalorder %s46, %s62
      %p64 = scmp.eq.s32.totalorder %s24, 0
      %p65 = por %p63, %p64
      %s67 = sadd.s32 %s66, 1
      %p70 = scmp.eq.s32.totalorder %s18, 1
      %p71 = scmp.ne.s32.totalorder %s66, %s68
      %p72 = scmp.eq.s32.totalorder %s18, 0
      %p73 = por %p71, %p72
      %p74 = scmp.ne.s32.totalorder %s66, %s68
      %p75 = scmp.eq.s32.totalorder %s23, 1
      %p76 = por %p74, %p75
      %p77 = scmp.ne.s32.totalorder %s68, %s69
      %p78 = scmp.eq.s32.totalorder %s23, 0
      %p79 = por %p77, %p78
      %p80 = scmp.ne.s32.totalorder %s68, %s69
      %p81 = scmp.eq.s32.totalorder %s24, 1
      %p82 = por %p80, %p81
      %p84 = scmp.ne.s32.totalorder %s69, %s83
      %p85 = scmp.eq.s32.totalorder %s24, 0
      %p86 = por %p84, %p85
      %s88 = sadd.s32 %s87, 1
      %p91 = scmp.eq.s32.totalorder %s18, 1
      %p92 = scmp.ne.s32.totalorder %s87, %s89
      %p93 = scmp.eq.s32.totalorder %s18, 0
      %p94 = por %p92, %p93
      %p95 = scmp.ne.s32.totalorder %s87, %s89
      %p96 = scmp.eq.s32.totalorder %s23, 1
      %p97 = por %p95, %p96
      %p98 = scmp.ne.s32.totalorder %s89, %s90
      %p99 = scmp.eq.s32.totalorder %s23, 0
      %p100 = por %p98, %p99
      %p101 = scmp.ne.s32.totalorder %s89, %s90
      %p102 = scmp.eq.s32.totalorder %s24, 1
      %p103 = por %p101, %p102
      %p105 = scmp.ne.s32.totalorder %s90, %s104
      %p106 = scmp.eq.s32.totalorder %s24, 0
      %p107 = por %p105, %p106
      %s109 = sadd.s32 %s108, 1
      %p112 = scmp.eq.s32.totalorder %s18, 1
      %p113 = scmp.ne.s32.totalorder %s108, %s110
      %p114 = scmp.eq.s32.totalorder %s18, 0
      %p115 = por %p113, %p114
      %p116 = scmp.ne.s32.totalorder %s108, %s110
      %p117 = scmp.eq.s32.totalorder %s23, 1
      %p118 = por %p116, %p117
      %p119 = scmp.ne.s32.totalorder %s110, %s111
      %p120 = scmp.eq.s32.totalorder %s23, 0
      %p121 = por %p119, %p120
      %p122 = scmp.ne.s32.totalorder %s110, %s111
      %p123 = scmp.eq.s32.totalorder %s24, 1
      %p124 = por %p122, %p123
      %p126 = scmp.ne.s32.totalorder %s111, %s125
      %p127 = scmp.eq.s32.totalorder %s24, 0
      %p128 = por %p126, %p127
      %s129 = ssub.s32 %s25, %s37
      %p130 = scmp.eq.s32.totalorder %s129, 0
      %s132 = sadd.s32 %s131, 1
      %s133 = scalar_select %p130, %s131, %s132
      %p136 = pneg %p130
      %p137 = scmp.eq.s32.totalorder %s18, 1
      %p138 = por %p136, %p137
      %p139 = scmp.ne.s32.totalorder %s131, %s134
      %p140 = scmp.eq.s32.totalorder %s18, 0
      %p141 = por %p139, %p140
      %p142 = scmp.ne.s32.totalorder %s131, %s134
      %p143 = scmp.eq.s32.totalorder %s23, 1
      %p144 = por %p142, %p143
      %p145 = scmp.ne.s32.totalorder %s134, %s135
      %p146 = scmp.eq.s32.totalorder %s23, 0
      %p147 = por %p145, %p146
      %p148 = scmp.ne.s32.totalorder %s134, %s135
      %p149 = scmp.eq.s32.totalorder %s24, 1
      %p150 = por %p148, %p149
      %p152 = scmp.ne.s32.totalorder %s135, %s151
      %p153 = scmp.eq.s32.totalorder %s24, 0
      %p154 = por %p152, %p153
      %s155 = ssub.s32 %s25, %s37
      %p156 = scmp.eq.s32.totalorder %s155, 0
      %s158 = sadd.s32 %s157, 1
      %s159 = scalar_select %p156, %s157, %s158
      %p162 = pneg %p156
      %p163 = scmp.eq.s32.totalorder %s18, 1
      %p164 = por %p162, %p163
      %p165 = scmp.ne.s32.totalorder %s157, %s160
      %p166 = scmp.eq.s32.totalorder %s18, 0
      %p167 = por %p165, %p166
      %p168 = scmp.ne.s32.totalorder %s157, %s160
      %p169 = scmp.eq.s32.totalorder %s23, 1
      %p170 = por %p168, %p169
      %p171 = scmp.ne.s32.totalorder %s160, %s161
      %p172 = scmp.eq.s32.totalorder %s23, 0
      %p173 = por %p171, %p172
      %p174 = scmp.ne.s32.totalorder %s160, %s161
      %p175 = scmp.eq.s32.totalorder %s24, 1
      %p176 = por %p174, %p175
      %p178 = scmp.ne.s32.totalorder %s161, %s177
      %p179 = scmp.eq.s32.totalorder %s24, 0
      %p180 = por %p178, %p179
      %p181 = scmp.le.s32.totalorder 1, %s18
      %p182 = scmp.lt.s32.totalorder %s18, 3
      %p183 = pnand %p181, %p182
      %p184 = pneg %p183
      // Predicated region
      $region9: #{tpu_custom_call.1} parent=5 // pred_check
        _
      $region10: #{tpu_custom_call.1} parent=5 // pred_check_branch
        %186 = sbr.rel (%p183) target = $region12
      $region11: #{tpu_custom_call.1} parent=5 // pred_region
        %s187 = ssub.s32 %s18, 1
        // Predicated region
        $region13: #{tpu_custom_call.1} parent=11 // pred_check
          %p188 = pneg %p79
        $region14: #{tpu_custom_call.1} parent=11 // pred_check_branch
          %190 = sbr.rel (%p188) target = $region16
        $region15: #{tpu_custom_call.1} parent=11 // pred_region
          _
        $region16: #{tpu_custom_call.1} parent=11 // pred_fallthru
          _
        // Predicated region
        $region17: #{tpu_custom_call.1} parent=11 // pred_check
          %p191 = pneg %p100
        $region18: #{tpu_custom_call.1} parent=11 // pred_check_branch
          %193 = sbr.rel (%p191) target = $region20
        $region19: #{tpu_custom_call.1} parent=11 // pred_region
          _
        $region20: #{tpu_custom_call.1} parent=11 // pred_fallthru
          _
        // Predicated region
        $region21: #{tpu_custom_call.1} parent=11 // pred_check
          %p194 = pneg %p121
        $region22: #{tpu_custom_call.1} parent=11 // pred_check_branch
          %196 = sbr.rel (%p194) target = $region24
        $region23: #{tpu_custom_call.1} parent=11 // pred_region
          _
        $region24: #{tpu_custom_call.1} parent=11 // pred_fallthru
          _
      $region12: #{tpu_custom_call.1} parent=5 // pred_fallthru
        _
      %p197 = scmp.lt.s32.totalorder %s18, 2
      // Predicated region
      $region25: #{tpu_custom_call.1} parent=5 // pred_check
        %p198 = pneg %p197
      $region26: #{tpu_custom_call.1} parent=5 // pred_check_branch
        %200 = sbr.rel (%p198) target = $region28
      $region27: #{tpu_custom_call.1} parent=5 // pred_region
        // Predicated region
        $region29: #{tpu_custom_call.1} parent=27 // pred_check
          %p201 = pneg %p52
        $region30: #{tpu_custom_call.1} parent=27 // pred_check_branch
          %203 = sbr.rel (%p201) target = $region32
        $region31: #{tpu_custom_call.1} parent=27 // pred_region
          %s204 = smul.u32 8, %s26
          %p205 = scmp.lt.s32.totalorder %s25, 1
          %s206 = scalar_select %p205, %s25, 1
          %p207 = scmp.lt.s32.totalorder %s204, 7
          %s208 = scalar_select %p207, %s204, 7
          %s209 = smul.addr %s206, 8
          %s210 = sadd.s32 %s208, %s209
          %s211 = smul.addr %s210, 8
          %s212 = scalar_lea.vmem %s0, %s211
          %s213 = smul.u32 8, %s26
        $region32: #{tpu_custom_call.1} parent=27 // pred_fallthru
          _
      $region28: #{tpu_custom_call.1} parent=5 // pred_fallthru
        _
      %p214 = scmp.le.s32.totalorder 1, %s18
      %p215 = scmp.lt.s32.totalorder %s18, 3
      %p216 = pnand %p214, %p215
      %p217 = pneg %p216
      // Predicated region
      $region33: #{tpu_custom_call.1} parent=5 // pred_check
        _
      $region34: #{tpu_custom_call.1} parent=5 // pred_check_branch
        %219 = sbr.rel (%p216) target = $region36
      $region35: #{tpu_custom_call.1} parent=5 // pred_region
        %s220 = ssub.s32 %s18, 1
        %s221 = smul.u32 8, %s28
        %p222 = scmp.lt.s32.totalorder %s27, 1
        %s223 = scalar_select %p222, %s27, 1
        %p224 = scmp.lt.s32.totalorder %s221, 7
        %s225 = scalar_select %p224, %s221, 7
        %s226 = smul.addr %s223, 8
        %s227 = sadd.s32 %s225, %s226
        %s228 = smul.addr %s227, 8
        %s229 = scalar_lea.vmem %s0, %s228
        %p230 = pneg %p58
        %p231 = pneg %p55
        %p232 = pneg %p79
        %p233 = pneg %p76
        %p234 = pneg %p100
        %p235 = pneg %p97
        %p236 = pneg %p121
        %p237 = pneg %p118
        %p238 = pneg %p147
        %p239 = pneg %p144
        %s240 = sand.u32 %s134, 1
        %s241 = scalar_lea.sflag [#allocation5], %s240
        %s242 = sand.u32 %s134, 1
        %s243 = scalar_lea.vmem [#allocation4], %s242
        %p244 = pneg %p173
        %p245 = pneg %p170
        %s246 = sand.u32 %s160, 1
        %s247 = scalar_lea.sflag [#allocation7], %s246
        %s248 = sand.u32 %s160, 1
        %s249 = scalar_lea.vmem [#allocation6], %s248
        %s250 = smul.u32 8, %s28
        %p251 = scmp.lt.s32.totalorder %s27, 1
        %s252 = scalar_select %p251, %s27, 1
        %p253 = scmp.lt.s32.totalorder %s250, 7
        %s254 = scalar_select %p253, %s250, 7
        %s255 = smul.addr %s252, 8
        %s256 = sadd.s32 %s254, %s255
        %s257 = smul.addr %s256, 8
        %s258 = scalar_lea.vmem %s0, %s257
        %s259 = smul.u32 8, %s28
        %p260 = scmp.eq.s32.totalorder %s28, 0
        // Predicated region
        $region37: #{tpu_custom_call.1} parent=35 // pred_check
          %p261 = pneg %p260
        $region38: #{tpu_custom_call.1} parent=35 // pred_check_branch
          %263 = sbr.rel (%p261) target = $region40
        $region39: #{tpu_custom_call.1} parent=35 // pred_region
          %264 = vst [vmem:[#allocation2] sm:$0x1] 0.0
          %265 = vst [vmem:[#allocation3] sm:$0x1] 0.0
        $region40: #{tpu_custom_call.1} parent=35 // pred_fallthru
          _
        %v266 = vld [vmem:[%s258] sm:$0xff]
        %v267 = vld [vmem:[%s258 + $0x8] sm:$0xff]
        %v268 = vld [vmem:[%s258 + $0x10] sm:$0xff]
        %v269 = vld [vmem:[%s258 + $0x18] sm:$0xff]
        %v270 = vld [vmem:[%s258 + $0x20] sm:$0xff]
        %v271 = vld [vmem:[%s258 + $0x28] sm:$0xff]
        %v272 = vld [vmem:[%s258 + $0x30] sm:$0xff]
        %v273 = vld [vmem:[%s258 + $0x38] sm:$0xff]
        %v274 = vld [vmem:[#allocation2] sm:$0x1]
        %vm275 = vcmask 523264
        %v277 = vsel %vm275, 1.0, 0
        %279 = vmatpush.msra.mxu0 0.0
        %280 = vmatpush.msra.mxu0 0.0
        %281 = vmatpush.msra.mxu0 0.0
        %282 = vmatpush.msra.mxu0 0.0
        %283 = vmatpush.msra.mxu0 0.0
        %284 = vmatpush.msra.mxu0 0.0
        %285 = vmatpush.msra.mxu0 0.0
        %286 = vmatpush.msra.mxu0 0.0
        %287 = vmatpush.msra.mxu0 %v273
        %288 = vmatpush.msra.mxu0 %v272
        %289 = vmatpush.msra.mxu0 %v271
        %290 = vmatpush.msra.mxu0 %v270
        %291 = vmatpush.msra.mxu0 %v269
        %292 = vmatpush.msra.mxu0 %v268
        %293 = vmatpush.msra.mxu0 %v267
        %294 = vmatpush.msra.mxu0 %v266
        %295 = vmatmul.f32.gmra.mxu0 %v277
        %v296 = vpop.f32.mrf.mxu0
        %v297 = vadd.f32 0.0, %v296
        %298 = vdwg.mxu0
        %v299 = vadd.f32 %v274, %v297
        %300 = vst [vmem:[#allocation2] sm:$0x1] %v299
        %v301 = vld [vmem:[#allocation3] sm:$0x1]
        %v302 = vmul.f32 %v266, %v266
        %v303 = vmul.f32 %v267, %v267
        %v304 = vmul.f32 %v268, %v268
        %v305 = vmul.f32 %v269, %v269
        %v306 = vmul.f32 %v270, %v270
        %v307 = vmul.f32 %v271, %v271
        %v308 = vmul.f32 %v272, %v272
        %v309 = vmul.f32 %v273, %v273
        %310 = vmatpush.msra.mxu0 0.0
        %311 = vmatpush.msra.mxu0 0.0
        %312 = vmatpush.msra.mxu0 0.0
        %313 = vmatpush.msra.mxu0 0.0
        %314 = vmatpush.msra.mxu0 0.0
        %315 = vmatpush.msra.mxu0 0.0
        %316 = vmatpush.msra.mxu0 0.0
        %317 = vmatpush.msra.mxu0 0.0
        %318 = vmatpush.msra.mxu0 %v309
        %319 = vmatpush.msra.mxu0 %v308
        %320 = vmatpush.msra.mxu0 %v307
        %321 = vmatpush.msra.mxu0 %v306
        %322 = vmatpush.msra.mxu0 %v305
        %323 = vmatpush.msra.mxu0 %v304
        %324 = vmatpush.msra.mxu0 %v303
        %325 = vmatpush.msra.mxu0 %v302
        %326 = vmatmul.f32.gmra.mxu0 %v277
        %v327 = vpop.f32.mrf.mxu0
        %v328 = vadd.f32 0.0, %v327
        %329 = vdwg.mxu0
        %v330 = vadd.f32 %v301, %v328
        %331 = vst [vmem:[#allocation3] sm:$0x1] %v330
        // Predicated region
        $region41: #{tpu_custom_call.1} parent=35 // pred_check
          %p332 = pneg %p260
        $region42: #{tpu_custom_call.1} parent=35 // pred_check_branch
          %334 = sbr.rel (%p332) target = $region44
        $region43: #{tpu_custom_call.1} parent=35 // pred_region
          %v335 = vld [vmem:[%s3] sm:$0xff]
          %v336 = vld [vmem:[%s3 + $0x8] sm:$0xff]
          %v337 = vld [vmem:[%s3 + $0x10] sm:$0xff]
          %v338 = vld [vmem:[%s3 + $0x18] sm:$0xff]
          %v339 = vld [vmem:[%s3 + $0x20] sm:$0xff]
          %v340 = vld [vmem:[%s3 + $0x28] sm:$0xff]
          %v341 = vld [vmem:[%s3 + $0x30] sm:$0xff]
          %v342 = vld [vmem:[%s3 + $0x38] sm:$0xff]
          %v343 = vld [vmem:[%s3 + $0x40] sm:$0xff]
          %v344 = vld [vmem:[%s3 + $0x48] sm:$0xff]
          %v345 = vld [vmem:[%s3 + $0x50] sm:$0xff]
          %v346 = vld [vmem:[%s3 + $0x58] sm:$0xff]
          %v347 = vld [vmem:[%s3 + $0x60] sm:$0xff]
          %v348 = vld [vmem:[%s3 + $0x68] sm:$0xff]
          %v349 = vld [vmem:[%s3 + $0x70] sm:$0xff]
          %v350 = vld [vmem:[%s3 + $0x78] sm:$0xff]
          %v351 = vld [vmem:[#allocation2] sm:$0x1]
          %352 = vmatpush.msra.mxu0 %v350
          %353 = vmatpush.msra.mxu0 %v349
          %354 = vmatpush.msra.mxu0 %v348
          %355 = vmatpush.msra.mxu0 %v347
          %356 = vmatpush.msra.mxu0 %v346
          %357 = vmatpush.msra.mxu0 %v345
          %358 = vmatpush.msra.mxu0 %v344
          %359 = vmatpush.msra.mxu0 %v343
          %360 = vmatpush.msra.mxu0 %v342
          %361 = vmatpush.msra.mxu0 %v341
          %362 = vmatpush.msra.mxu0 %v340
          %363 = vmatpush.msra.mxu0 %v339
          %364 = vmatpush.msra.mxu0 %v338
          %365 = vmatpush.msra.mxu0 %v337
          %366 = vmatpush.msra.mxu0 %v336
          %367 = vmatpush.msra.mxu0 %v335
          %368 = vmatmul.f32.gmra.mxu0 %v351
          %v369 = vpop.f32.mrf.mxu0
          %v370 = vadd.f32 0.0, %v369
          %371 = vdwg.mxu0
          %v372 = vld [vmem:[#allocation3] sm:$0x1]
          %373 = vmatpush.msra.mxu0 %v350
          %374 = vmatpush.msra.mxu0 %v349
          %375 = vmatpush.msra.mxu0 %v348
          %376 = vmatpush.msra.mxu0 %v347
          %377 = vmatpush.msra.mxu0 %v346
          %378 = vmatpush.msra.mxu0 %v345
          %379 = vmatpush.msra.mxu0 %v344
          %380 = vmatpush.msra.mxu0 %v343
          %381 = vmatpush.msra.mxu0 %v342
          %382 = vmatpush.msra.mxu0 %v341
          %383 = vmatpush.msra.mxu0 %v340
          %384 = vmatpush.msra.mxu0 %v339
          %385 = vmatpush.msra.mxu0 %v338
          %386 = vmatpush.msra.mxu0 %v337
          %387 = vmatpush.msra.mxu0 %v336
          %388 = vmatpush.msra.mxu0 %v335
          %389 = vmatmul.f32.gmra.mxu0 %v372
          %v390 = vpop.f32.mrf.mxu0
          %v391 = vadd.f32 0.0, %v390
          %392 = vdwg.mxu0
          %v393 = vrcp.pop 64.0
          %v394 = vmul.f32 64.0, %v393
          %v395 = vsub.f32 1.0, %v394
          %v396 = vmul.f32 %v393, %v395
          %v397 = vadd.f32 %v393, %v396
          %vm398 = vweird.f32 %v393
          %v399 = vsel %vm398, %v393, %v397
          %v400 = vmul.f32 %v370, %v399
          %v401 = vmul.f32 %v391, %v399
          %v402 = vmul.f32 %v400, %v400
          %v403 = vsub.f32 %v401, %v402
          %v404 = vmax.f32 %v403, 0.0
          %v405 = vadd.f32 %v404, 1e-06
          %v406 = vrsqrt.pop %v405
          %v407 = vmul.f32 %v406, %v405
          %v408 = vmul.f32 %v407, %v406
          %v409 = vmul.f32 0.5, %v408
          %v410 = vsub.f32 1.5, %v409
          %v411 = vmul.f32 %v406, %v410
          %vm412 = vweird.f32 %v405
          %vm413 = vweird.f32 %v406
          %vm414 = vmor %vm412, %vm413
          %v415 = vsel %vm414, %v406, %v411
          %vm416 = vcmask 261120
          %v418 = vsel %vm416, %v400, 0
          %v421 = vsel %vm416, %v335, 0
          %v424 = vsel %vm416, %v336, 0
          %v427 = vsel %vm416, %v337, 0
          %v430 = vsel %vm416, %v338, 0
          %v433 = vsel %vm416, %v339, 0
          %v436 = vsel %vm416, %v340, 0
          %v439 = vsel %vm416, %v341, 0
          %v442 = vsel %vm416, %v342, 0
          %v445 = vsel %vm416, %v343, 0
          %v448 = vsel %vm416, %v344, 0
          %v451 = vsel %vm416, %v345, 0
          %v454 = vsel %vm416, %v346, 0
          %v457 = vsel %vm416, %v347, 0
          %v460 = vsel %vm416, %v348, 0
          %v463 = vsel %vm416, %v349, 0
          %v466 = vsel %vm416, %v350, 0
          %468 = vmatpush.xpose.msra.mxu0 %v466
          %469 = vmatpush.xpose.msra.mxu0 %v463
          %470 = vmatpush.xpose.msra.mxu0 %v460
          %471 = vmatpush.xpose.msra.mxu0 %v457
          %472 = vmatpush.xpose.msra.mxu0 %v454
          %473 = vmatpush.xpose.msra.mxu0 %v451
          %474 = vmatpush.xpose.msra.mxu0 %v448
          %475 = vmatpush.xpose.msra.mxu0 %v445
          %476 = vmatpush.xpose.msra.mxu0 %v442
          %477 = vmatpush.xpose.msra.mxu0 %v439
          %478 = vmatpush.xpose.msra.mxu0 %v436
          %479 = vmatpush.xpose.msra.mxu0 %v433
          %480 = vmatpush.xpose.msra.mxu0 %v430
          %481 = vmatpush.xpose.msra.mxu0 %v427
          %482 = vmatpush.xpose.msra.mxu0 %v424
          %483 = vmatpush.xpose.msra.mxu0 %v421
          %484 = vmatmul.f32.gmra.mxu0 %v418
          %v485 = vpop.f32.mrf.mxu0
          %v486 = vadd.f32 0.0, %v485
          %487 = vdwg.mxu0
          %v489 = vsel %vm416, %v415, 0
          %491 = vmatpush.xpose.msra.mxu0 %v466
          %492 = vmatpush.xpose.msra.mxu0 %v463
          %493 = vmatpush.xpose.msra.mxu0 %v460
          %494 = vmatpush.xpose.msra.mxu0 %v457
          %495 = vmatpush.xpose.msra.mxu0 %v454
          %496 = vmatpush.xpose.msra.mxu0 %v451
          %497 = vmatpush.xpose.msra.mxu0 %v448
          %498 = vmatpush.xpose.msra.mxu0 %v445
          %499 = vmatpush.xpose.msra.mxu0 %v442
          %500 = vmatpush.xpose.msra.mxu0 %v439
          %501 = vmatpush.xpose.msra.mxu0 %v436
          %502 = vmatpush.xpose.msra.mxu0 %v433
          %503 = vmatpush.xpose.msra.mxu0 %v430
          %504 = vmatpush.xpose.msra.mxu0 %v427
          %505 = vmatpush.xpose.msra.mxu0 %v424
          %506 = vmatpush.xpose.msra.mxu0 %v421
          %507 = vmatmul.f32.gmra.mxu0 %v489
          %v508 = vpop.f32.mrf.mxu0
          %v509 = vadd.f32 0.0, %v508
          %510 = vdwg.mxu0
          %v511 = vld [vmem:[%s1] sm:$0x1]
          %v512 = vmul.f32 %v509, %v511
          %513 = vst [vmem:[%s243] sm:$0x1] %v512
          %v514 = vld [vmem:[%s2] sm:$0x1]
          %v515 = vmul.f32 %v486, %v512
          %v516 = vsub.f32 %v514, %v515
          %517 = vst [vmem:[%s249] sm:$0x1] %v516
        $region44: #{tpu_custom_call.1} parent=35 // pred_fallthru
          _
        %s518 = sand.u32 %s134, 1
        %s519 = scalar_lea.sflag [#allocation5], %s518
        %s520 = sand.u32 %s134, 1
        %s521 = scalar_lea.vmem [#allocation4], %s520
        %s522 = sand.u32 %s160, 1
        %s523 = scalar_lea.sflag [#allocation7], %s522
        %s524 = sand.u32 %s160, 1
        %s525 = scalar_lea.vmem [#allocation6], %s524
        // Predicated region
        $region45: #{tpu_custom_call.1} parent=35 // pred_check
          %p526 = pneg %p144
        $region46: #{tpu_custom_call.1} parent=35 // pred_check_branch
          %528 = sbr.rel (%p526) target = $region48
        $region47: #{tpu_custom_call.1} parent=35 // pred_region
          %530 = vsyncadd %s519, 0
          %s531 = scalar_lea.hbm %s4, %s27
          %s533 = sshll.u32 %s521, 4
          %s534 = int_to_ptr.vmem [resolvable:$true] %s533
          %s535 = sshll.u32 %s531, 4
          %s536 = int_to_ptr.hbm [resolvable:$true] %s535
          %538 = dma.vmem_to_hbm [thread:$0]  %s534, 16, %s536, %s519
        $region48: #{tpu_custom_call.1} parent=35 // pred_fallthru
          _
        // Predicated region
        $region49: #{tpu_custom_call.1} parent=35 // pred_check
          %p539 = pneg %p170
        $region50: #{tpu_custom_call.1} parent=35 // pred_check_branch
          %541 = sbr.rel (%p539) target = $region52
        $region51: #{tpu_custom_call.1} parent=35 // pred_region
          %543 = vsyncadd %s523, 0
          %s544 = scalar_lea.hbm %s5, %s27
          %s546 = sshll.u32 %s525, 4
          %s547 = int_to_ptr.vmem [resolvable:$true] %s546
          %s548 = sshll.u32 %s544, 4
          %s549 = int_to_ptr.hbm [resolvable:$true] %s548
          %551 = dma.vmem_to_hbm [thread:$0]  %s547, 16, %s549, %s523
        $region52: #{tpu_custom_call.1} parent=35 // pred_fallthru
          _
      $region36: #{tpu_custom_call.1} parent=5 // pred_fallthru
        _
      %p552 = scmp.le.s32.totalorder 2, %s18
      // Predicated region
      $region53: #{tpu_custom_call.1} parent=5 // pred_check
        %p553 = pneg %p552
      $region54: #{tpu_custom_call.1} parent=5 // pred_check_branch
        %555 = sbr.rel (%p553) target = $region56
      $region55: #{tpu_custom_call.1} parent=5 // pred_region
        %s556 = ssub.s32 %s18, 2
        // Predicated region
        $region57: #{tpu_custom_call.1} parent=55 // pred_check
          %p557 = pneg %p150
        $region58: #{tpu_custom_call.1} parent=55 // pred_check_branch
          %559 = sbr.rel (%p557) target = $region60
        $region59: #{tpu_custom_call.1} parent=55 // pred_region
          %s560 = sand.u32 %s135, 1
          %s561 = scalar_lea.sflag [#allocation5], %s560
          %s562 = sand.u32 %s135, 1
          %s563 = scalar_lea.vmem [#allocation4], %s562
          %565 = dma.done %s561, 16
        $region60: #{tpu_custom_call.1} parent=55 // pred_fallthru
          _
        // Predicated region
        $region61: #{tpu_custom_call.1} parent=55 // pred_check
          %p566 = pneg %p176
        $region62: #{tpu_custom_call.1} parent=55 // pred_check_branch
          %568 = sbr.rel (%p566) target = $region64
        $region63: #{tpu_custom_call.1} parent=55 // pred_region
          %s569 = sand.u32 %s161, 1
          %s570 = scalar_lea.sflag [#allocation7], %s569
          %s571 = sand.u32 %s161, 1
          %s572 = scalar_lea.vmem [#allocation6], %s571
          %574 = dma.done %s570, 16
        $region64: #{tpu_custom_call.1} parent=55 // pred_fallthru
          _
      $region56: #{tpu_custom_call.1} parent=5 // pred_fallthru
        _
    $region6: #{tpu_custom_call.1} parent=1 // loop_footer
      %s22 = sadd.s32 1, %s18
    $region7: #{tpu_custom_call.1} parent=1 // loop_footer_branch
      %17 = sbr.rel target = $region3
    $region8: #{tpu_custom_call.1} parent=1 // loop_exit
      _
    %575 = vsyncpa [#allocation5], 1
    %s576 = scalar_lea.sflag [#allocation5], 1
    %577 = vsyncpa %s576, 1
    %578 = vsyncpa [#allocation7], 1
    %s579 = scalar_lea.sflag [#allocation7], 1
    %580 = vsyncpa %s579, 1

</llo_original>
